<compile_context>
chip_gen: v7x
topology: tpu7x:2x2x1
jax: 0.10.0
libtpu: 0.0.40
codegen_flags: <defaults>
</compile_context>

<pallas_src>
import functools
import math

import jax
import jax.numpy as jnp
from jax import lax
from jax.experimental import pallas as pl
from jax.experimental.pallas import tpu as pltpu


# ---------------------------------------------------------------------------
# Small helpers
# ---------------------------------------------------------------------------
def _round_up(x, m):
    return ((x + m - 1) // m) * m


def _tile_and_pad(dim, target, mult):
    """(tile, padded_dim): tile is a multiple of `mult` and divides padded_dim."""
    if dim <= target:
        t = _round_up(dim, mult)
        return t, t
    return target, _round_up(dim, target)


def _pick_tile(dim, target, mult):
    """(tile, padded_dim).  When `dim` is already a multiple of `mult`, pick the
    largest tile <= target that divides it exactly (no padding, so callers that
    pre-align their dims get the exact output shape back with no slice copy)."""
    if dim > 0 and dim % mult == 0:
        t = min(dim, max((target // mult) * mult, mult))
        while dim % t != 0:
            t -= mult
        return t, dim
    return _tile_and_pad(dim, target, mult)


def _vmem_config():
    """Generation-aware (chunk_budget_bytes, vmem_limit_bytes).
    v5e/v6e have 128 MiB VMEM per core -> bigger chunks + 64 MiB scoped limit;
    v7x only has 64 MiB -> stay conservative."""
    cap = 128 * 1024 * 1024
    try:
        info = pltpu.get_tpu_info()
        cap = int(getattr(info, "vmem_capacity_bytes", cap) or cap)
    except Exception:
        pass
    if cap >= 100 * 1024 * 1024:          # v5e / v6e
        return 40 * 1024 * 1024, 64 * 1024 * 1024
    return 18 * 1024 * 1024, 32 * 1024 * 1024   # v7x


def _pick_batch_tiles(B):
    """(Bp, Bt): padded batch and per-grid-step batch tile.  Bt <= 32 keeps the
    per-step recurrence working set vreg-resident and gives v7x's second
    TensorCore an independent 'parallel' slice when Bp > 32."""
    Bp = _round_up(max(B, 1), 8)
    if Bp <= 32:
        return Bp, Bp          # single full-dim tile (always layout-legal)
    Bp = _round_up(B, 32)
    return Bp, 32


def _pick_time_chunk(T, Bt, Hp, budget_bytes):
    """Largest multiple-of-8 time chunk whose per-chunk VMEM working set
    (double-buffered bf16 gi0 in + bf16 y1 out, bf16 y0 / f32 gi1 scratch, and
    the resident bf16 weight blocks) fits the generation-aware budget."""
    per_row = 30 * Hp                       # bytes per (time*batch) row (see gru2_stack)
    fixed = 36 * Hp * Hp + 64 * 1024        # 3 double-buffered bf16 weight blocks + slack
    rows = max((budget_bytes - fixed) // max(per_row, 1), 8 * Bt)
    tt = max(8, min(256, ((rows // max(Bt, 1)) // 8) * 8))
    return min(tt, _round_up(max(T, 1), 8))


def _pack_gates_t(w, Hp, rows=None):
    """w: (3H, in_dim) torch-layout GRU weight -> transposed (rows, 3*Hp) with each
    gate block [r|z|n] placed at a lane-aligned column offset g*Hp (zero padded)."""
    three_h, in_dim = w.shape
    H = three_h // 3
    rows = in_dim if rows is None else rows
    out = jnp.zeros((rows, 3 * Hp), jnp.float32)
    for g in range(3):
        out = out.at[:in_dim, g * Hp:g * Hp + H].set(w[g * H:(g + 1) * H, :].T)
    return out


def _pack_gi_bias(b_ih, b_hh, Hp):
    """Fold b_hh's r/z thirds into the input-gate bias (plain adds in the GRU cell);
    the n-gate hidden bias stays separate because it is multiplied by r."""
    H = b_ih.shape[0] // 3
    out = jnp.zeros((1, 3 * Hp), jnp.float32)
    for g in range(3):
        v = b_ih[g * H:(g + 1) * H]
        if g < 2:
            v = v + b_hh[g * H:(g + 1) * H]
        out = out.at[0, g * Hp:g * Hp + H].set(v)
    return out


def _pack_n_bias(b_hh, Hp):
    H = b_hh.shape[0] // 3
    return jnp.zeros((1, Hp), jnp.float32).at[0, :H].set(b_hh[2 * H:3 * H])


# ---------------------------------------------------------------------------
# Generic tiled matmul + bias kernel
#   used for: (a) hoisted layer-0 GRU input projection, (b) final vocab Linear
# ---------------------------------------------------------------------------
def _matmul_bias_kernel(x_ref, wt_ref, b_ref, o_ref, acc_ref):
    @pl.when(pl.program_id(2) == 0)
    def _():
        acc_ref[...] = jnp.zeros_like(acc_ref)

    acc_ref[...] += jnp.dot(x_ref[...], wt_ref[...],
                            preferred_element_type=jnp.float32)

    @pl.when(pl.program_id(2) == pl.num_programs(2) - 1)
    def _():
        o_ref[...] = (acc_ref[...] + b_ref[...]).astype(o_ref.dtype)


def matmul_bias(x, w_t, b2d, *, out_dtype=jnp.float32,
                tm_target=256, tn_target=512, tk_target=512,
                vmem_limit=32 * 1024 * 1024):
    """(M, K) @ (K, N) + (1, N) -> (Mp, Np) in `out_dtype`.

    bf16 MXU operands, f32 accumulation; tiled with parallel (M, N) axes and an
    arbitrary reduction axis.  The output is returned un-sliced: callers that
    pre-align M/N (multiples of 8 / 128) get the exact shape back with no extra
    HBM slice / re-pad copies."""
    M, K = x.shape
    Kw, N = w_t.shape
    assert K == Kw, (K, Kw)
    tm, Mp = _pick_tile(M, tm_target, 8)
    tk, Kp = _pick_tile(K, tk_target, 128)
    tn, Np = _pick_tile(N, tn_target, 128)

    xp = x.astype(jnp.bfloat16)
    if (Mp, Kp) != (M, K):
        xp = jnp.pad(xp, ((0, Mp - M), (0, Kp - K)))
    wtp = w_t.astype(jnp.bfloat16)
    if (Kp, Np) != (K, N):
        wtp = jnp.pad(wtp, ((0, Kp - K), (0, Np - N)))
    bp = b2d.astype(jnp.float32)
    if Np != N:
        bp = jnp.pad(bp, ((0, 0), (0, Np - N)))

    return pl.pallas_call(
        _matmul_bias_kernel,
        out_shape=jax.ShapeDtypeStruct((Mp, Np), out_dtype),
        grid_spec=pltpu.PrefetchScalarGridSpec(
            num_scalar_prefetch=0,
            grid=(Mp // tm, Np // tn, Kp // tk),
            in_specs=[
                pl.BlockSpec((tm, tk), lambda i, j, k: (i, k)),
                pl.BlockSpec((tk, tn), lambda i, j, k: (k, j)),
                pl.BlockSpec((1, tn), lambda i, j, k: (0, j)),
            ],
            out_specs=pl.BlockSpec((tm, tn), lambda i, j, k: (i, j)),
            scratch_shapes=[pltpu.VMEM((tm, tn), jnp.float32)],
        ),
        compiler_params=pltpu.CompilerParams(
            dimension_semantics=("parallel", "parallel", "arbitrary"),
            vmem_limit_bytes=vmem_limit,
        ),
    )(xp, wtp, bp)


# ---------------------------------------------------------------------------
# Fused 2-layer GRU kernel, (batch-tile, time-chunk) grid
#   gi0 (layer-0 input gates) precomputed outside; layer-1 input gates are one
#   chunk-sized GEMM; hidden state carried in vregs inside the chunk and in
#   persistent VMEM scratch across chunks.
# ---------------------------------------------------------------------------
def _gru2_kernel(T_true, Tt, Bt, Hp,
                 gi0_ref, whh0_ref, bhn0_ref,
                 wih1_ref, bgi1_ref, whh1_ref, bhn1_ref, hinit_ref,
                 y1_ref, hT_ref,
                 h0_scr, h1_scr, y0_scr, gi1_scr):
    c = pl.program_id(1)

    @pl.when(c == 0)
    def _():
        h0_scr[...] = hinit_ref[0]
        h1_scr[...] = hinit_ref[1]

    ragged = (T_true % Tt) != 0                 # static: only last chunk can be ragged
    valid = jnp.minimum(Tt, T_true - c * Tt) if ragged else Tt

    def gru_cell(gi, gh, bh_n, h_prev):
        # lane-aligned gate slices (Hp is a multiple of 128); r/z hidden biases are
        # already folded into gi, only the n-gate hidden bias is applied here.
        r = jax.nn.sigmoid(gi[:, 0:Hp] + gh[:, 0:Hp])
        z = jax.nn.sigmoid(gi[:, Hp:2 * Hp] + gh[:, Hp:2 * Hp])
        n = jnp.tanh(gi[:, 2 * Hp:3 * Hp] + r * (gh[:, 2 * Hp:3 * Hp] + bh_n))
        return (1.0 - z) * n + z * h_prev

    whh0 = whh0_ref[...]
    bhn0 = bhn0_ref[...]

    # ---- layer 0: serial recurrence over the chunk (input gates precomputed) ----
    def step0(t, h):
        gi = gi0_ref[t].astype(jnp.float32)                          # (Bt, 3Hp)
        gh = jnp.dot(h.astype(jnp.bfloat16), whh0,
                     preferred_element_type=jnp.float32)
        h_new = gru_cell(gi, gh, bhn0, h)
        if ragged:
            h_new = jnp.where(t < valid, h_new, h)                   # freeze past seq end
        row = pl.multiple_of(t * Bt, Bt)
        y0_scr[pl.ds(row, Bt), :] = h_new.astype(jnp.bfloat16)
        return h_new

    h0 = lax.fori_loop(0, Tt, step0, h0_scr[...], unroll=4)
    h0_scr[...] = h0

    # ---- layer-1 input gates: ONE chunk-sized GEMM over bf16 layer-0 outputs ----
    gi1_scr[...] = jnp.dot(y0_scr[...], wih1_ref[...],
                           preferred_element_type=jnp.float32) + bgi1_ref[...]

    whh1 = whh1_ref[...]
    bhn1 = bhn1_ref[...]

    # ---- layer 1: serial recurrence over the chunk ----
    def step1(t, h):
        row = pl.multiple_of(t * Bt, Bt)
        gi = gi1_scr[pl.ds(row, Bt), :]
        gh = jnp.dot(h.astype(jnp.bfloat16), whh1,
                     preferred_element_type=jnp.float32)
        h_new = gru_cell(gi, gh, bhn1, h)
        if ragged:
            h_new = jnp.where(t < valid, h_new, h)
        y1_ref[t] = h_new.astype(y1_ref.dtype)                       # bf16 store
        return h_new

    h1 = lax.fori_loop(0, Tt, step1, h1_scr[...], unroll=4)
    h1_scr[...] = h1

    # final hidden state: written once, on the last time chunk only
    @pl.when(c == pl.num_programs(1) - 1)
    def _():
        hT_ref[0] = h0
        hT_ref[1] = h1


def gru2_stack(gi0, whh0_t, bhh0_n, wih1_t, bgi1, whh1_t, bhh1_n, h_init,
               *, T, Tt, Bt, Hp, vmem_limit):
    """gi0: (Tp, Bp, 3Hp) bf16 time-major layer-0 input gates (r/z hidden biases
    pre-folded).  Returns (y1 (Tp, Bp, Hp) bf16 layer-1 outputs, hT (2, Bp, Hp) f32)."""
    Tp, Bp, _ = gi0.shape
    n_chunks = Tp // Tt
    n_btiles = Bp // Bt
    rows = Tt * Bt
    kernel = functools.partial(_gru2_kernel, T, Tt, Bt, Hp)

    y1, hT = pl.pallas_call(
        kernel,
        out_shape=(
            jax.ShapeDtypeStruct((Tp, Bp, Hp), jnp.bfloat16),
            jax.ShapeDtypeStruct((2, Bp, Hp), jnp.float32),
        ),
        grid_spec=pltpu.PrefetchScalarGridSpec(
            num_scalar_prefetch=0,
            grid=(n_btiles, n_chunks),          # batch tiles parallel, time chunks serial
            in_specs=[
                pl.BlockSpec((Tt, Bt, 3 * Hp), lambda b, c: (c, b, 0)),  # gi0 chunk (bf16)
                pl.BlockSpec((Hp, 3 * Hp), lambda b, c: (0, 0)),         # w_hh0^T (bf16)
                pl.BlockSpec((1, Hp), lambda b, c: (0, 0)),              # b_hh0 n-gate
                pl.BlockSpec((Hp, 3 * Hp), lambda b, c: (0, 0)),         # w_ih1^T (bf16)
                pl.BlockSpec((1, 3 * Hp), lambda b, c: (0, 0)),          # b_ih1 (+ b_hh1 r/z)
                pl.BlockSpec((Hp, 3 * Hp), lambda b, c: (0, 0)),         # w_hh1^T (bf16)
                pl.BlockSpec((1, Hp), lambda b, c: (0, 0)),              # b_hh1 n-gate
                pl.BlockSpec((2, Bt, Hp), lambda b, c: (0, b, 0)),       # initial hidden
            ],
            out_specs=(
                pl.BlockSpec((Tt, Bt, Hp), lambda b, c: (c, b, 0)),      # layer-1 outputs
                pl.BlockSpec((2, Bt, Hp), lambda b, c: (0, b, 0)),       # final hidden
            ),
            scratch_shapes=[
                pltpu.VMEM((Bt, Hp), jnp.float32),              # running h, layer 0
                pltpu.VMEM((Bt, Hp), jnp.float32),              # running h, layer 1
                pltpu.VMEM((rows, Hp), jnp.bfloat16),           # layer-0 chunk output
                pltpu.VMEM((rows, 3 * Hp), jnp.float32),        # layer-1 input gates
            ],
        ),
        compiler_params=pltpu.CompilerParams(
            dimension_semantics=("parallel", "arbitrary"),
            vmem_limit_bytes=vmem_limit,
        ),
    )(gi0, whh0_t, bhh0_n, wih1_t, bgi1, whh1_t, bhh1_n, h_init)
    return y1, hT


# ---------------------------------------------------------------------------
# Model: parameters + forward
# ---------------------------------------------------------------------------
class ImprovedRNNModelPallas:
    def __init__(self, vocab_len, embedding_dim, gru_hidden_dim, num_layers=2,
                 key=jax.random.PRNGKey(0)):
        # The fused Pallas GRU kernel is specialised for the module's default
        # num_layers=2 (layer-0 gates hoisted outside, layer-1 gates per chunk).
        assert num_layers == 2, "Pallas kernel is specialised for num_layers=2"
        self.vocab_len = vocab_len
        self.embedding_dim = embedding_dim
        self.gru_dim = gru_hidden_dim
        self.num_layers = num_layers
        H = gru_hidden_dim
        self.Hp = _round_up(H, 128)                 # lane-aligned hidden size
        self.Vp = _round_up(vocab_len, 128)         # lane-aligned vocab size
        self._chunk_budget, self._vmem_limit = _vmem_config()

        keys = jax.random.split(key, 2 + 2 * num_layers)
        k_emb, k_fc = keys[0], keys[1]

        # nn.Embedding default init: N(0, 1) (untouched by weights_init)
        self.embedding = jax.random.normal(
            k_emb, (vocab_len, embedding_dim), dtype=jnp.float32)

        # GRU params (gate order [r, z, n], like torch.nn.GRU):
        #   weight_ih: xavier_uniform_, weight_hh: orthogonal_, biases 0
        raw = []
        for layer in range(num_layers):
            in_dim = embedding_dim if layer == 0 else H
            k_ih, k_hh = keys[2 + 2 * layer], keys[3 + 2 * layer]
            bound_ih = math.sqrt(6.0 / (3 * H + in_dim))
            w_ih = jax.random.uniform(k_ih, (3 * H, in_dim), jnp.float32,
                                      minval=-bound_ih, maxval=bound_ih)
            a = jax.random.normal(k_hh, (3 * H, H), jnp.float32)
            q, _ = jnp.linalg.qr(a)                     # orthonormal columns
            raw.append((w_ih, q.astype(jnp.float32),
                        jnp.zeros((3 * H,), jnp.float32),
                        jnp.zeros((3 * H,), jnp.float32)))

        # fc: Linear(H, vocab), weights_init uniform(-w_bound, w_bound), bias 0
        w_bound = math.sqrt(6.0 / (H + vocab_len))
        fc_w = jax.random.uniform(k_fc, (vocab_len, H), jnp.float32,
                                  minval=-w_bound, maxval=w_bound)
        fc_b = jnp.zeros((vocab_len,), jnp.float32)

        # ---- precompute transposed / gate-packed / bf16-cast kernel weights once ----
        Hp, Vp = self.Hp, self.Vp
        (w_ih0, w_hh0, b_ih0, b_hh0), (w_ih1, w_hh1, b_ih1, b_hh1) = raw
        self.w_ih0_t = _pack_gates_t(w_ih0, Hp).astype(jnp.bfloat16)            # (E, 3Hp)
        self.b_gi0 = _pack_gi_bias(b_ih0, b_hh0, Hp)                            # (1, 3Hp)
        self.w_hh0_t = _pack_gates_t(w_hh0, Hp, rows=Hp).astype(jnp.bfloat16)   # (Hp, 3Hp)
        self.b_hh0_n = _pack_n_bias(b_hh0, Hp)                                  # (1, Hp)
        self.w_ih1_t = _pack_gates_t(w_ih1, Hp, rows=Hp).astype(jnp.bfloat16)   # (Hp, 3Hp)
        self.b_gi1 = _pack_gi_bias(b_ih1, b_hh1, Hp)                            # (1, 3Hp)
        self.w_hh1_t = _pack_gates_t(w_hh1, Hp, rows=Hp).astype(jnp.bfloat16)   # (Hp, 3Hp)
        self.b_hh1_n = _pack_n_bias(b_hh1, Hp)                                  # (1, Hp)

        # fc weights pre-padded to lane-aligned vocab so the Linear needs no padding
        self.fc_w_t = (jnp.zeros((Hp, Vp), jnp.float32)
                       .at[:H, :vocab_len].set(fc_w.T).astype(jnp.bfloat16))    # (Hp, Vp)
        self.fc_b = jnp.zeros((1, Vp), jnp.float32).at[0, :vocab_len].set(fc_b)

    def __call__(self, sentence, hidden=None):
        """sentence: (B, T) int32 token ids.  Returns (logits (B,T,V), hidden (L,B,H))."""
        B, T = sentence.shape
        H, Hp, Vp, E = self.gru_dim, self.Hp, self.Vp, self.embedding_dim
        Bp, Bt = _pick_batch_tiles(B)
        Tt = _pick_time_chunk(T, Bt, Hp, self._chunk_budget)
        Tp = _round_up(T, Tt)

        # Embedding lookup (plain JAX glue)
        x = jnp.take(self.embedding, sentence, axis=0)               # (B, T, E)
        x_tm = jnp.transpose(x, (1, 0, 2))                           # (T, B, E) time-major
        x_tm = jnp.pad(x_tm, ((0, Tp - T), (0, Bp - B), (0, 0)))     # (Tp, Bp, E)

        # Hoisted layer-0 input projection: ONE big GEMM over all timesteps, emitted
        # bf16 directly in the padded GRU-ready layout (no slice / re-pad copies).
        gi0 = matmul_bias(x_tm.reshape(Tp * Bp, E), self.w_ih0_t, self.b_gi0,
                          out_dtype=jnp.bfloat16,
                          vmem_limit=self._vmem_limit)               # (Tp*Bp, 3Hp) bf16
        gi0 = gi0.reshape(Tp, Bp, 3 * Hp)                            # free reshape

        if hidden is None:
            h_init = jnp.zeros((self.num_layers, Bp, Hp), jnp.float32)
        else:
            h_init = jnp.pad(hidden.astype(jnp.float32),
                             ((0, 0), (0, Bp - B), (0, Hp - H)))

        y1, hT = gru2_stack(gi0, self.w_hh0_t, self.b_hh0_n,
                            self.w_ih1_t, self.b_gi1,
                            self.w_hh1_t, self.b_hh1_n,
                            h_init, T=T, Tt=Tt, Bt=Bt, Hp=Hp,
                            vmem_limit=self._vmem_limit)

        new_hidden = hT[:, :B, :H]                                   # (L, B, H)

        # Final Linear over every timestep.  The (T,B)->(B,T) reorder is done on the
        # narrow bf16 hidden slab (never on the V-wide logits); padded rows flow
        # through the GEMM and are sliced once at the very end.
        y_bm = jnp.transpose(y1, (1, 0, 2)).reshape(Bp * Tp, Hp)     # (Bp*Tp, Hp) bf16
        logits = matmul_bias(y_bm, self.fc_w_t, self.fc_b,
                             tm_target=512, tn_target=1024, tk_target=1024,
                             vmem_limit=self._vmem_limit)            # (Bp*Tp, Vp) f32
        logits = logits.reshape(Bp, Tp, Vp)[:B, :T, :self.vocab_len]
        return logits, new_hidden


# ---------------------------------------------------------------------------
if __name__ == "__main__":
    VOCAB = 64
    EMBED = 32
    HIDDEN = 32
    LAYERS = 2
    B, T = 2, 8

    key = jax.random.PRNGKey(0)
    k_model, k_tok = jax.random.split(key)

    model = ImprovedRNNModelPallas(VOCAB, EMBED, HIDDEN, num_layers=LAYERS, key=k_model)

    sentence = jax.random.randint(k_tok, (B, T), 0, VOCAB, dtype=jnp.int32)

    logits, hidden = model(sentence, hidden=None)
    logits = jax.block_until_ready(logits)
    hidden = jax.block_until_ready(hidden)

    assert logits.shape == (B, T, VOCAB), logits.shape
    assert hidden.shape == (LAYERS, B, HIDDEN), hidden.shape
    assert bool(jnp.all(jnp.isfinite(logits))) and bool(jnp.all(jnp.isfinite(hidden)))

    print("KERNEL_OK")
</pallas_src>

<mosaic_0001>
module attributes {stable_mosaic.version = 11 : i64} {
  func.func @_matmul_bias_kernel(%arg0: i32, %arg1: i32, %arg2: i32, %arg3: memref<64x128xbf16, #tpu.memory_space<vmem>>, %arg4: memref<128x384xbf16, #tpu.memory_space<vmem>>, %arg5: memref<1x384xf32, #tpu.memory_space<vmem>>, %arg6: memref<64x384xbf16, #tpu.memory_space<vmem>>, %arg7: memref<64x384xf32, #tpu.memory_space<vmem>>) attributes {dimension_semantics = [#tpu.dimension_semantics<parallel>, #tpu.dimension_semantics<parallel>, #tpu.dimension_semantics<arbitrary>], iteration_bounds = array<i64: 1, 1, 1>, scalar_prefetch = 0 : i64, scratch_operands = 1 : i64, tpu.core_type = #tpu.core_type<tc>, window_params = [{transform_indices = @transform_0, window_bounds = array<i64: 64, 128>}, {transform_indices = @transform_1, window_bounds = array<i64: 128, 384>}, {transform_indices = @transform_2, window_bounds = array<i64: 1, 384>}, {transform_indices = @transform_3, window_bounds = array<i64: 64, 384>}]} {
    %c0_i32 = arith.constant 0 : i32
    %0 = arith.cmpi eq, %arg2, %c0_i32 : i32
    %1 = arith.extui %0 : i1 to i32
    %c0_i32_0 = arith.constant 0 : i32
    %2 = arith.cmpi ne, %1, %c0_i32_0 : i32
    scf.if %2 {
      %cst_10 = arith.constant 0.000000e+00 : f32
      %12 = vector.broadcast %cst_10 : f32 to vector<64x384xf32>
      %c0_11 = arith.constant 0 : index
      %c0_12 = arith.constant 0 : index
      %13 = vector.load %arg7[%c0_11, %c0_12] : memref<64x384xf32, #tpu.memory_space<vmem>>, vector<64x384xf32>
      tpu.vector_store %arg7[%c0_11, %c0_12], %12 {strides = array<i32>} : memref<64x384xf32, #tpu.memory_space<vmem>>, vector<64x384xf32>,
    } else {
    }
    %c0 = arith.constant 0 : index
    %c0_1 = arith.constant 0 : index
    %3 = vector.load %arg7[%c0, %c0_1] : memref<64x384xf32, #tpu.memory_space<vmem>>, vector<64x384xf32>
    %c0_2 = arith.constant 0 : index
    %c0_3 = arith.constant 0 : index
    %4 = vector.load %arg3[%c0_2, %c0_3] : memref<64x128xbf16, #tpu.memory_space<vmem>>, vector<64x128xbf16>
    %c0_4 = arith.constant 0 : index
    %c0_5 = arith.constant 0 : index
    %5 = vector.load %arg4[%c0_4, %c0_5] : memref<128x384xbf16, #tpu.memory_space<vmem>>, vector<128x384xbf16>
    %cst = arith.constant dense<0.000000e+00> : vector<64x384xf32>
    %6 = tpu.matmul %4, %5, %cst {dimension_numbers = #tpu.dot_dimension_numbers<[1], [0], [0], [1], [0, 0, 1, 1], [], []>} : vector<64x128xbf16>, vector<128x384xbf16>, vector<64x384xf32> -> vector<64x384xf32>
    %7 = arith.addf %3, %6 : vector<64x384xf32>
    %c0_6 = arith.constant 0 : index
    %c0_7 = arith.constant 0 : index
    %8 = vector.load %arg7[%c0_6, %c0_7] : memref<64x384xf32, #tpu.memory_space<vmem>>, vector<64x384xf32>
    tpu.vector_store %arg7[%c0_6, %c0_7], %7 {strides = array<i32>} : memref<64x384xf32, #tpu.memory_space<vmem>>, vector<64x384xf32>,
    %c0_i32_8 = arith.constant 0 : i32
    %9 = arith.cmpi eq, %arg2, %c0_i32_8 : i32
    %10 = arith.extui %9 : i1 to i32
    %c0_i32_9 = arith.constant 0 : i32
    %11 = arith.cmpi ne, %10, %c0_i32_9 : i32
    scf.if %11 {
      %c0_10 = arith.constant 0 : index
      %c0_11 = arith.constant 0 : index
      %12 = vector.load %arg7[%c0_10, %c0_11] : memref<64x384xf32, #tpu.memory_space<vmem>>, vector<64x384xf32>
      %c0_12 = arith.constant 0 : index
      %c0_13 = arith.constant 0 : index
      %13 = vector.load %arg5[%c0_12, %c0_13] : memref<1x384xf32, #tpu.memory_space<vmem>>, vector<1x384xf32>
      %14 = vector.broadcast %13 : vector<1x384xf32> to vector<64x384xf32>
      %15 = arith.addf %12, %14 : vector<64x384xf32>
      %16 = arith.truncf %15 : vector<64x384xf32> to vector<64x384xbf16>
      %c0_14 = arith.constant 0 : index
      %c0_15 = arith.constant 0 : index
      %17 = vector.load %arg6[%c0_14, %c0_15] : memref<64x384xbf16, #tpu.memory_space<vmem>>, vector<64x384xbf16>
      tpu.vector_store %arg6[%c0_14, %c0_15], %16 {strides = array<i32>} : memref<64x384xbf16, #tpu.memory_space<vmem>>, vector<64x384xbf16>,
    } else {
    }
    return
  }
  func.func @transform_0(%arg0: i32, %arg1: i32, %arg2: i32) -> (i32, i32) {
    %c0_i32 = arith.constant 0 : i32
    return %arg0, %arg2 : i32, i32
  }
  func.func @transform_1(%arg0: i32, %arg1: i32, %arg2: i32) -> (i32, i32) {
    %c0_i32 = arith.constant 0 : i32
    return %arg2, %arg1 : i32, i32
  }
  func.func @transform_2(%arg0: i32, %arg1: i32, %arg2: i32) -> (i32, i32) {
    %c0_i32 = arith.constant 0 : i32
    %c0_i32_0 = arith.constant 0 : i32
    return %c0_i32, %arg1 : i32, i32
  }
  func.func @transform_3(%arg0: i32, %arg1: i32, %arg2: i32) -> (i32, i32) {
    %c0_i32 = arith.constant 0 : i32
    return %arg0, %arg1 : i32, i32
  }
}

</mosaic_0001>

<llo_original>
// kernel: tpu_custom_call.1
$region0: #{tpu_custom_call.1}
  #allocation0 [shape = 'u32[]', space=smem, size = 0x4, offset = 0x4, fixed_abs, tag = 'smem constant byte address 0x4 - core index']
  #allocation1 [shape = 'u32[144,128]{1,0:T(1,128)}', space=vmem, size = 0x12000, scoped, tag = 'internal scratch']
  #allocation2 [shape = 'f32[64,384]{1,0:T(8,128)}', space=vmem, size = 0x18000, scoped, tag = 'scratch operand']
  %s0 = inlined_call_operand.hbm [shape: bf16[64,128], index: 0, kind: input, shape index: {}]
  %s1 = inlined_call_operand.hbm [shape: bf16[128,384], index: 1, kind: input, shape index: {}]
  %s2 = inlined_call_operand.hbm [shape: f32[1,384], index: 2, kind: input, shape index: {}]
  %s3 = inlined_call_operand.hbm [shape: bf16[64,384], index: 3, kind: output, shape index: {}]
  %s4 = sld [smem:[#allocation0]]
  $region42: #{tpu_custom_call.1} parent=0
    _
  %s6 = ssub.s32 1, %s4
  %s7 = scalar_select 0, %s6, %s4
  $region1: #{tpu_custom_call.1} parent=0
    #allocation3 [shape = 'u8[16384]{0}', space=vmem, size = 0x4000, scoped, tag = 'input window, operand 0, single buffered']
    #allocation4 [shape = 's32[1]{0}', space=sflag, size = 0x4, scoped, tag = 'scoped memory for tpu_custom_call.1']
    #allocation5 [shape = 's32[1]{0}', space=sflag, size = 0x4, scoped, tag = 'scoped memory for tpu_custom_call.1']
    #allocation6 [shape = 'u8[98304]{0}', space=vmem, size = 0x18000, scoped, tag = 'input window, operand 1, single buffered']
    #allocation7 [shape = 's32[1]{0}', space=sflag, size = 0x4, scoped, tag = 'scoped memory for tpu_custom_call.1']
    #allocation8 [shape = 'u8[1536]{0}', space=vmem, size = 0x800, scoped, tag = 'input window, operand 2, single buffered']
    #allocation9 [shape = 'u8[49152]{0}', space=vmem, size = 0xc000, scoped, tag = 'output window, operand 0, single buffered']
    %8 = vsyncpa [#allocation4], 0
    %9 = vsyncpa [#allocation7], 0
    %10 = vsyncpa [#allocation5], 0
    // Predicated region
    $region2: #{tpu_custom_call.1} parent=1 // pred_check
      _
    $region3: #{tpu_custom_call.1} parent=1 // pred_check_branch
      %12 = sbr.rel (0) target = $region5
    $region4: #{tpu_custom_call.1} parent=1 // pred_region
      %s14 = ssub.s32 512, 512
      %15 = vsyncadd [#allocation4], %s14
      %s16 = sshll.u32 [#allocation3], 4
      %s17 = int_to_ptr.vmem [resolvable:$true] %s16
      %22 = dma.hbm_to_vmem [thread:$0]  %s0, 512, %s17, [#allocation4], 64, 64, 4
    $region5: #{tpu_custom_call.1} parent=1 // pred_fallthru
      _
    // Predicated region
    $region6: #{tpu_custom_call.1} parent=1 // pred_check
      _
    $region7: #{tpu_custom_call.1} parent=1 // pred_check_branch
      %24 = sbr.rel (0) target = $region9
    $region8: #{tpu_custom_call.1} parent=1 // pred_region
      %s26 = ssub.s32 3072, 3072
      %27 = vsyncadd [#allocation7], %s26
      %s28 = sshll.u32 [#allocation6], 4
      %s29 = int_to_ptr.vmem [resolvable:$true] %s28
      %34 = dma.hbm_to_vmem [thread:$0]  %s1, 3072, %s29, [#allocation7], 192, 192, 12
    $region9: #{tpu_custom_call.1} parent=1 // pred_fallthru
      _
    // Predicated region
    $region10: #{tpu_custom_call.1} parent=1 // pred_check
      _
    $region11: #{tpu_custom_call.1} parent=1 // pred_check_branch
      %36 = sbr.rel (0) target = $region13
    $region12: #{tpu_custom_call.1} parent=1 // pred_region
      %s38 = ssub.s32 48, 48
      %39 = vsyncadd [#allocation7], %s38
      %s41 = sshll.u32 [#allocation8], 4
      %s42 = int_to_ptr.vmem [resolvable:$true] %s41
      %44 = dma.hbm_to_vmem [thread:$0]  %s2, 48, %s42, [#allocation7]
    $region13: #{tpu_custom_call.1} parent=1 // pred_fallthru
      _
    // Predicated region
    $region14: #{tpu_custom_call.1} parent=1 // pred_check
      _
    $region15: #{tpu_custom_call.1} parent=1 // pred_check_branch
      %46 = sbr.rel (0) target = $region17
    $region16: #{tpu_custom_call.1} parent=1 // pred_region
      %47 = dma.done [#allocation4], 512
    $region17: #{tpu_custom_call.1} parent=1 // pred_fallthru
      _
    // Predicated region
    $region18: #{tpu_custom_call.1} parent=1 // pred_check
      _
    $region19: #{tpu_custom_call.1} parent=1 // pred_check_branch
      %49 = sbr.rel (0) target = $region21
    $region20: #{tpu_custom_call.1} parent=1 // pred_region
      %50 = dma.done [#allocation7], 3072
    $region21: #{tpu_custom_call.1} parent=1 // pred_fallthru
      _
    // Predicated region
    $region22: #{tpu_custom_call.1} parent=1 // pred_check
      _
    $region23: #{tpu_custom_call.1} parent=1 // pred_check_branch
      %52 = sbr.rel (0) target = $region25
    $region24: #{tpu_custom_call.1} parent=1 // pred_region
      %53 = dma.done [#allocation7], 48
    $region25: #{tpu_custom_call.1} parent=1 // pred_fallthru
      _
    %p55 = scmp.eq.s32.totalorder 0, 0
    // Predicated region
    $region26: #{tpu_custom_call.1} parent=1 // pred_check
      %p56 = pneg %p55
    $region27: #{tpu_custom_call.1} parent=1 // pred_check_branch
      %58 = sbr.rel (%p56) target = $region29
    $region28: #{tpu_custom_call.1} parent=1 // pred_region
      %59 = vst [vmem:[#allocation2] sm:$0xff] 0.0
      %60 = vst [vmem:[#allocation2 + $0x8] sm:$0xff] 0.0
      %61 = vst [vmem:[#allocation2 + $0x10] sm:$0xff] 0.0
      %62 = vst [vmem:[#allocation2 + $0x18] sm:$0xff] 0.0
      %63 = vst [vmem:[#allocation2 + $0x20] sm:$0xff] 0.0
      %64 = vst [vmem:[#allocation2 + $0x28] sm:$0xff] 0.0
      %65 = vst [vmem:[#allocation2 + $0x30] sm:$0xff] 0.0
      %66 = vst [vmem:[#allocation2 + $0x38] sm:$0xff] 0.0
      %67 = vst [vmem:[#allocation2 + $0x40] sm:$0xff] 0.0
      %68 = vst [vmem:[#allocation2 + $0x48] sm:$0xff] 0.0
      %69 = vst [vmem:[#allocation2 + $0x50] sm:$0xff] 0.0
      %70 = vst [vmem:[#allocation2 + $0x58] sm:$0xff] 0.0
      %71 = vst [vmem:[#allocation2 + $0x60] sm:$0xff] 0.0
      %72 = vst [vmem:[#allocation2 + $0x68] sm:$0xff] 0.0
      %73 = vst [vmem:[#allocation2 + $0x70] sm:$0xff] 0.0
      %74 = vst [vmem:[#allocation2 + $0x78] sm:$0xff] 0.0
      %75 = vst [vmem:[#allocation2 + $0x80] sm:$0xff] 0.0
      %76 = vst [vmem:[#allocation2 + $0x88] sm:$0xff] 0.0
      %77 = vst [vmem:[#allocation2 + $0x90] sm:$0xff] 0.0
      %78 = vst [vmem:[#allocation2 + $0x98] sm:$0xff] 0.0
      %79 = vst [vmem:[#allocation2 + $0xa0] sm:$0xff] 0.0
      %80 = vst [vmem:[#allocation2 + $0xa8] sm:$0xff] 0.0
      %81 = vst [vmem:[#allocation2 + $0xb0] sm:$0xff] 0.0
      %82 = vst [vmem:[#allocation2 + $0xb8] sm:$0xff] 0.0
    $region29: #{tpu_custom_call.1} parent=1 // pred_fallthru
      _
    %v83 = vld [vmem:[#allocation2] sm:$0xff]
    %v84 = vld [vmem:[#allocation2 + $0x8] sm:$0xff]
    %v85 = vld [vmem:[#allocation2 + $0x10] sm:$0xff]
    %v86 = vld [vmem:[#allocation2 + $0x18] sm:$0xff]
    %v87 = vld [vmem:[#allocation2 + $0x20] sm:$0xff]
    %v88 = vld [vmem:[#allocation2 + $0x28] sm:$0xff]
    %v89 = vld [vmem:[#allocation2 + $0x30] sm:$0xff]
    %v90 = vld [vmem:[#allocation2 + $0x38] sm:$0xff]
    %v91 = vld [vmem:[#allocation2 + $0x40] sm:$0xff]
    %v92 = vld [vmem:[#allocation2 + $0x48] sm:$0xff]
    %v93 = vld [vmem:[#allocation2 + $0x50] sm:$0xff]
    %v94 = vld [vmem:[#allocation2 + $0x58] sm:$0xff]
    %v95 = vld [vmem:[#allocation2 + $0x60] sm:$0xff]
    %v96 = vld [vmem:[#allocation2 + $0x68] sm:$0xff]
    %v97 = vld [vmem:[#allocation2 + $0x70] sm:$0xff]
    %v98 = vld [vmem:[#allocation2 + $0x78] sm:$0xff]
    %v99 = vld [vmem:[#allocation2 + $0x80] sm:$0xff]
    %v100 = vld [vmem:[#allocation2 + $0x88] sm:$0xff]
    %v101 = vld [vmem:[#allocation2 + $0x90] sm:$0xff]
    %v102 = vld [vmem:[#allocation2 + $0x98] sm:$0xff]
    %v103 = vld [vmem:[#allocation2 + $0xa0] sm:$0xff]
    %v104 = vld [vmem:[#allocation2 + $0xa8] sm:$0xff]
    %v105 = vld [vmem:[#allocation2 + $0xb0] sm:$0xff]
    %v106 = vld [vmem:[#allocation2 + $0xb8] sm:$0xff]
    %v107 = vld [vmem:[#allocation3] sm:$0xf]
    %v108 = vld [vmem:[#allocation3 + $0x4] sm:$0xf]
    %v109 = vld [vmem:[#allocation3 + $0x8] sm:$0xf]
    %v110 = vld [vmem:[#allocation3 + $0xc] sm:$0xf]
    %v111 = vld [vmem:[#allocation3 + $0x10] sm:$0xf]
    %v112 = vld [vmem:[#allocation3 + $0x14] sm:$0xf]
    %v113 = vld [vmem:[#allocation3 + $0x18] sm:$0xf]
    %v114 = vld [vmem:[#allocation3 + $0x1c] sm:$0xf]
    %v115 = vld [vmem:[#allocation6] sm:$0xff]
    %v116 = vld [vmem:[#allocation6 + $0x8] sm:$0xf]
    %v117 = vld [vmem:[#allocation6 + $0xc] sm:$0xff]
    %v118 = vld [vmem:[#allocation6 + $0x14] sm:$0xf]
    %v119 = vld [vmem:[#allocation6 + $0x18] sm:$0xff]
    %v120 = vld [vmem:[#allocation6 + $0x20] sm:$0xf]
    %v121 = vld [vmem:[#allocation6 + $0x24] sm:$0xff]
    %v122 = vld [vmem:[#allocation6 + $0x2c] sm:$0xf]
    %v123 = vld [vmem:[#allocation6 + $0x30] sm:$0xff]
    %v124 = vld [vmem:[#allocation6 + $0x38] sm:$0xf]
    %v125 = vld [vmem:[#allocation6 + $0x3c] sm:$0xff]
    %v126 = vld [vmem:[#allocation6 + $0x44] sm:$0xf]
    %v127 = vld [vmem:[#allocation6 + $0x48] sm:$0xff]
    %v128 = vld [vmem:[#allocation6 + $0x50] sm:$0xf]
    %v129 = vld [vmem:[#allocation6 + $0x54] sm:$0xff]
    %v130 = vld [vmem:[#allocation6 + $0x5c] sm:$0xf]
    %v131 = vld [vmem:[#allocation6 + $0x60] sm:$0xff]
    %v132 = vld [vmem:[#allocation6 + $0x68] sm:$0xf]
    %v133 = vld [vmem:[#allocation6 + $0x6c] sm:$0xff]
    %v134 = vld [vmem:[#allocation6 + $0x74] sm:$0xf]
    %v135 = vld [vmem:[#allocation6 + $0x78] sm:$0xff]
    %v136 = vld [vmem:[#allocation6 + $0x80] sm:$0xf]
    %v137 = vld [vmem:[#allocation6 + $0x84] sm:$0xff]
    %v138 = vld [vmem:[#allocation6 + $0x8c] sm:$0xf]
    %v139 = vld [vmem:[#allocation6 + $0x90] sm:$0xff]
    %v140 = vld [vmem:[#allocation6 + $0x98] sm:$0xf]
    %v141 = vld [vmem:[#allocation6 + $0x9c] sm:$0xff]
    %v142 = vld [vmem:[#allocation6 + $0xa4] sm:$0xf]
    %v143 = vld [vmem:[#allocation6 + $0xa8] sm:$0xff]
    %v144 = vld [vmem:[#allocation6 + $0xb0] sm:$0xf]
    %v145 = vld [vmem:[#allocation6 + $0xb4] sm:$0xff]
    %v146 = vld [vmem:[#allocation6 + $0xbc] sm:$0xf]
    %v155 = vunpack.c.l.b16 %v107
    %v156 = vunpack.c.l.b16 %v108
    %v157 = vunpack.c.l.b16 %v109
    %v158 = vunpack.c.l.b16 %v110
    %v159 = vunpack.c.l.b16 %v111
    %v160 = vunpack.c.l.b16 %v112
    %v161 = vunpack.c.l.b16 %v113
    %v162 = vunpack.c.l.b16 %v114
    %v163 = vpack.c.b16 %v156, %v155
    %v164 = vpack.c.b16 %v158, %v157
    %v165 = vpack.c.b16 %v160, %v159
    %v166 = vpack.c.b16 %v162, %v161
    %v203 = vunpack.c.l.b16 %v115
    %v204 = vunpack.c.h.b16 %v115
    %v205 = vunpack.c.l.b16 %v116
    %v206 = vunpack.c.l.b16 %v117
    %v207 = vunpack.c.h.b16 %v117
    %v208 = vunpack.c.l.b16 %v118
    %v209 = vunpack.c.l.b16 %v119
    %v210 = vunpack.c.h.b16 %v119
    %v211 = vunpack.c.l.b16 %v120
    %v212 = vunpack.c.l.b16 %v121
    %v213 = vunpack.c.h.b16 %v121
    %v214 = vunpack.c.l.b16 %v122
    %v215 = vunpack.c.l.b16 %v123
    %v216 = vunpack.c.h.b16 %v123
    %v217 = vunpack.c.l.b16 %v124
    %v218 = vunpack.c.l.b16 %v125
    %v219 = vunpack.c.h.b16 %v125
    %v220 = vunpack.c.l.b16 %v126
    %v221 = vunpack.c.l.b16 %v127
    %v222 = vunpack.c.h.b16 %v127
    %v223 = vunpack.c.l.b16 %v128
    %v224 = vunpack.c.l.b16 %v129
    %v225 = vunpack.c.h.b16 %v129
    %v226 = vunpack.c.l.b16 %v130
    %v227 = vunpack.c.l.b16 %v131
    %v228 = vunpack.c.h.b16 %v131
    %v229 = vunpack.c.l.b16 %v132
    %v230 = vunpack.c.l.b16 %v133
    %v231 = vunpack.c.h.b16 %v133
    %v232 = vunpack.c.l.b16 %v134
    %v233 = vunpack.c.l.b16 %v135
    %v234 = vunpack.c.h.b16 %v135
    %v235 = vunpack.c.l.b16 %v136
    %v236 = vunpack.c.l.b16 %v137
    %v237 = vunpack.c.h.b16 %v137
    %v238 = vunpack.c.l.b16 %v138
    %v239 = vunpack.c.l.b16 %v139
    %v240 = vunpack.c.h.b16 %v139
    %v241 = vunpack.c.l.b16 %v140
    %v242 = vunpack.c.l.b16 %v141
    %v243 = vunpack.c.h.b16 %v141
    %v244 = vunpack.c.l.b16 %v142
    %v245 = vunpack.c.l.b16 %v143
    %v246 = vunpack.c.h.b16 %v143
    %v247 = vunpack.c.l.b16 %v144
    %v248 = vunpack.c.l.b16 %v145
    %v249 = vunpack.c.h.b16 %v145
    %v250 = vunpack.c.l.b16 %v146
    %v251 = vpack.c.b16 %v206, %v203
    %v252 = vpack.c.b16 %v207, %v204
    %v253 = vpack.c.b16 %v208, %v205
    %v254 = vpack.c.b16 %v212, %v209
    %v255 = vpack.c.b16 %v213, %v210
    %v256 = vpack.c.b16 %v214, %v211
    %v257 = vpack.c.b16 %v218, %v215
    %v258 = vpack.c.b16 %v219, %v216
    %v259 = vpack.c.b16 %v220, %v217
    %v260 = vpack.c.b16 %v224, %v221
    %v261 = vpack.c.b16 %v225, %v222
    %v262 = vpack.c.b16 %v226, %v223
    %v263 = vpack.c.b16 %v230, %v227
    %v264 = vpack.c.b16 %v231, %v228
    %v265 = vpack.c.b16 %v232, %v229
    %v266 = vpack.c.b16 %v236, %v233
    %v267 = vpack.c.b16 %v237, %v234
    %v268 = vpack.c.b16 %v238, %v235
    %v269 = vpack.c.b16 %v242, %v239
    %v270 = vpack.c.b16 %v243, %v240
    %v271 = vpack.c.b16 %v244, %v241
    %v272 = vpack.c.b16 %v248, %v245
    %v273 = vpack.c.b16 %v249, %v246
    %v274 = vpack.c.b16 %v250, %v247
    %299 = vmatprep.subr.bf16.mxu0 %v252
    %300 = vmatpush1.bf16.msra.mxu0 %v251
    %301 = vmatprep.subr.bf16.mxu0 %v255
    %302 = vmatpush1.bf16.msra.mxu0 %v254
    %303 = vmatprep.subr.bf16.mxu0 %v258
    %304 = vmatpush1.bf16.msra.mxu0 %v257
    %305 = vmatprep.subr.bf16.mxu0 %v261
    %306 = vmatpush1.bf16.msra.mxu0 %v260
    %307 = vmatprep.subr.bf16.mxu0 %v264
    %308 = vmatpush1.bf16.msra.mxu0 %v263
    %309 = vmatprep.subr.bf16.mxu0 %v267
    %310 = vmatpush1.bf16.msra.mxu0 %v266
    %311 = vmatprep.subr.bf16.mxu0 %v270
    %312 = vmatpush1.bf16.msra.mxu0 %v269
    %313 = vmatprep.subr.bf16.mxu0 %v273
    %314 = vmatpush1.bf16.msra.mxu0 %v272
    %315 = vmatprep.subr.bf16.mxu0 0
    %316 = vmatpush1.bf16.msra.mxu0 0
    %317 = vmatprep.subr.bf16.mxu0 0
    %318 = vmatpush1.bf16.msra.mxu0 0
    %319 = vmatprep.subr.bf16.mxu0 0
    %320 = vmatpush1.bf16.msra.mxu0 0
    %321 = vmatprep.subr.bf16.mxu0 0
    %322 = vmatpush1.bf16.msra.mxu0 0
    %323 = vmatprep.subr.bf16.mxu0 0
    %324 = vmatpush1.bf16.msra.mxu0 0
    %325 = vmatprep.subr.bf16.mxu0 0
    %326 = vmatpush1.bf16.msra.mxu0 0
    %327 = vmatprep.subr.bf16.mxu0 0
    %328 = vmatpush1.bf16.msra.mxu0 0
    %329 = vmatprep.subr.bf16.mxu0 0
    %330 = vmatpush1.bf16.msra.mxu0 0
    %331 = vmatprep.mubr.bf16.mxu0 0
    %332 = vmatmul.mubr.bf16.gmra.mrb[0].mxu0 %v163
    %v333 = vpop.f32.mrb[0].mxu0
    %v334 = vadd.f32 0.0, %v333
    %v335 = vpop.f32.mrb[0].mxu0
    %v336 = vadd.f32 0.0, %v335
    %v337 = vpop.f32.mrb[0].mxu0
    %v338 = vadd.f32 0.0, %v337
    %v339 = vpop.f32.mrb[0].mxu0
    %v340 = vadd.f32 0.0, %v339
    %341 = vmatprep.mubr.bf16.mxu0 0
    %342 = vmatmul.mubr.bf16.gmra.mrb[0].mxu0 %v164
    %v343 = vpop.f32.mrb[0].mxu0
    %v344 = vadd.f32 0.0, %v343
    %v345 = vpop.f32.mrb[0].mxu0
    %v346 = vadd.f32 0.0, %v345
    %v347 = vpop.f32.mrb[0].mxu0
    %v348 = vadd.f32 0.0, %v347
    %v349 = vpop.f32.mrb[0].mxu0
    %v350 = vadd.f32 0.0, %v349
    %351 = vmatprep.mubr.bf16.mxu0 0
    %352 = vmatmul.mubr.bf16.gmra.mrb[0].mxu0 %v165
    %v353 = vpop.f32.mrb[0].mxu0
    %v354 = vadd.f32 0.0, %v353
    %v355 = vpop.f32.mrb[0].mxu0
    %v356 = vadd.f32 0.0, %v355
    %v357 = vpop.f32.mrb[0].mxu0
    %v358 = vadd.f32 0.0, %v357
    %v359 = vpop.f32.mrb[0].mxu0
    %v360 = vadd.f32 0.0, %v359
    %361 = vmatprep.mubr.bf16.mxu0 0
    %362 = vmatmul.mubr.bf16.gmra.mrb[0].mxu0 %v166
    %v363 = vpop.f32.mrb[0].mxu0
    %v364 = vadd.f32 0.0, %v363
    %v365 = vpop.f32.mrb[0].mxu0
    %v366 = vadd.f32 0.0, %v365
    %v367 = vpop.f32.mrb[0].mxu0
    %v368 = vadd.f32 0.0, %v367
    %v369 = vpop.f32.mrb[0].mxu0
    %v370 = vadd.f32 0.0, %v369
    %371 = vdwg.mxu0
    %372 = vmatprep.subr.bf16.mxu0 0
    %373 = vmatpush1.bf16.msra.mxu0 %v253
    %374 = vmatprep.subr.bf16.mxu0 0
    %375 = vmatpush1.bf16.msra.mxu0 %v256
    %376 = vmatprep.subr.bf16.mxu0 0
    %377 = vmatpush1.bf16.msra.mxu0 %v259
    %378 = vmatprep.subr.bf16.mxu0 0
    %379 = vmatpush1.bf16.msra.mxu0 %v262
    %380 = vmatprep.subr.bf16.mxu0 0
    %381 = vmatpush1.bf16.msra.mxu0 %v265
    %382 = vmatprep.subr.bf16.mxu0 0
    %383 = vmatpush1.bf16.msra.mxu0 %v268
    %384 = vmatprep.subr.bf16.mxu0 0
    %385 = vmatpush1.bf16.msra.mxu0 %v271
    %386 = vmatprep.subr.bf16.mxu0 0
    %387 = vmatpush1.bf16.msra.mxu0 %v274
    %388 = vmatprep.subr.bf16.mxu0 0
    %389 = vmatpush1.bf16.msra.mxu0 0
    %390 = vmatprep.subr.bf16.mxu0 0
    %391 = vmatpush1.bf16.msra.mxu0 0
    %392 = vmatprep.subr.bf16.mxu0 0
    %393 = vmatpush1.bf16.msra.mxu0 0
    %394 = vmatprep.subr.bf16.mxu0 0
    %395 = vmatpush1.bf16.msra.mxu0 0
    %396 = vmatprep.subr.bf16.mxu0 0
    %397 = vmatpush1.bf16.msra.mxu0 0
    %398 = vmatprep.subr.bf16.mxu0 0
    %399 = vmatpush1.bf16.msra.mxu0 0
    %400 = vmatprep.subr.bf16.mxu0 0
    %401 = vmatpush1.bf16.msra.mxu0 0
    %402 = vmatprep.subr.bf16.mxu0 0
    %403 = vmatpush1.bf16.msra.mxu0 0
    %404 = vmatprep.mubr.bf16.mxu0 0
    %405 = vmatmul.mubr.bf16.gmra.mrb[0].mxu0 %v163
    %v406 = vpop.f32.mrb[0].mxu0
    %v407 = vadd.f32 0.0, %v406
    %v408 = vpop.f32.mrb[0].mxu0
    %v409 = vpop.f32.mrb[0].mxu0
    %v410 = vadd.f32 0.0, %v409
    %v411 = vpop.f32.mrb[0].mxu0
    %412 = vmatprep.mubr.bf16.mxu0 0
    %413 = vmatmul.mubr.bf16.gmra.mrb[0].mxu0 %v164
    %v414 = vpop.f32.mrb[0].mxu0
    %v415 = vadd.f32 0.0, %v414
    %v416 = vpop.f32.mrb[0].mxu0
    %v417 = vpop.f32.mrb[0].mxu0
    %v418 = vadd.f32 0.0, %v417
    %v419 = vpop.f32.mrb[0].mxu0
    %420 = vmatprep.mubr.bf16.mxu0 0
    %421 = vmatmul.mubr.bf16.gmra.mrb[0].mxu0 %v165
    %v422 = vpop.f32.mrb[0].mxu0
    %v423 = vadd.f32 0.0, %v422
    %v424 = vpop.f32.mrb[0].mxu0
    %v425 = vpop.f32.mrb[0].mxu0
    %v426 = vadd.f32 0.0, %v425
    %v427 = vpop.f32.mrb[0].mxu0
    %428 = vmatprep.mubr.bf16.mxu0 0
    %429 = vmatmul.mubr.bf16.gmra.mrb[0].mxu0 %v166
    %v430 = vpop.f32.mrb[0].mxu0
    %v431 = vadd.f32 0.0, %v430
    %v432 = vpop.f32.mrb[0].mxu0
    %v433 = vpop.f32.mrb[0].mxu0
    %v434 = vadd.f32 0.0, %v433
    %v435 = vpop.f32.mrb[0].mxu0
    %436 = vdwg.mxu0
    %v437 = vadd.f32 %v83, %v334
    %v438 = vadd.f32 %v84, %v336
    %v439 = vadd.f32 %v85, %v407
    %v440 = vadd.f32 %v86, %v338
    %v441 = vadd.f32 %v87, %v340
    %v442 = vadd.f32 %v88, %v410
    %v443 = vadd.f32 %v89, %v344
    %v444 = vadd.f32 %v90, %v346
    %v445 = vadd.f32 %v91, %v415
    %v446 = vadd.f32 %v92, %v348
    %v447 = vadd.f32 %v93, %v350
    %v448 = vadd.f32 %v94, %v418
    %v449 = vadd.f32 %v95, %v354
    %v450 = vadd.f32 %v96, %v356
    %v451 = vadd.f32 %v97, %v423
    %v452 = vadd.f32 %v98, %v358
    %v453 = vadd.f32 %v99, %v360
    %v454 = vadd.f32 %v100, %v426
    %v455 = vadd.f32 %v101, %v364
    %v456 = vadd.f32 %v102, %v366
    %v457 = vadd.f32 %v103, %v431
    %v458 = vadd.f32 %v104, %v368
    %v459 = vadd.f32 %v105, %v370
    %v460 = vadd.f32 %v106, %v434
    %461 = vst [vmem:[#allocation2] sm:$0xff] %v437
    %462 = vst [vmem:[#allocation2 + $0x8] sm:$0xff] %v438
    %463 = vst [vmem:[#allocation2 + $0x10] sm:$0xff] %v439
    %464 = vst [vmem:[#allocation2 + $0x18] sm:$0xff] %v440
    %465 = vst [vmem:[#allocation2 + $0x20] sm:$0xff] %v441
    %466 = vst [vmem:[#allocation2 + $0x28] sm:$0xff] %v442
    %467 = vst [vmem:[#allocation2 + $0x30] sm:$0xff] %v443
    %468 = vst [vmem:[#allocation2 + $0x38] sm:$0xff] %v444
    %469 = vst [vmem:[#allocation2 + $0x40] sm:$0xff] %v445
    %470 = vst [vmem:[#allocation2 + $0x48] sm:$0xff] %v446
    %471 = vst [vmem:[#allocation2 + $0x50] sm:$0xff] %v447
    %472 = vst [vmem:[#allocation2 + $0x58] sm:$0xff] %v448
    %473 = vst [vmem:[#allocation2 + $0x60] sm:$0xff] %v449
    %474 = vst [vmem:[#allocation2 + $0x68] sm:$0xff] %v450
    %475 = vst [vmem:[#allocation2 + $0x70] sm:$0xff] %v451
    %476 = vst [vmem:[#allocation2 + $0x78] sm:$0xff] %v452
    %477 = vst [vmem:[#allocation2 + $0x80] sm:$0xff] %v453
    %478 = vst [vmem:[#allocation2 + $0x88] sm:$0xff] %v454
    %479 = vst [vmem:[#allocation2 + $0x90] sm:$0xff] %v455
    %480 = vst [vmem:[#allocation2 + $0x98] sm:$0xff] %v456
    %481 = vst [vmem:[#allocation2 + $0xa0] sm:$0xff] %v457
    %482 = vst [vmem:[#allocation2 + $0xa8] sm:$0xff] %v458
    %483 = vst [vmem:[#allocation2 + $0xb0] sm:$0xff] %v459
    %484 = vst [vmem:[#allocation2 + $0xb8] sm:$0xff] %v460
    // Predicated region
    $region30: #{tpu_custom_call.1} parent=1 // pred_check
      %p485 = pneg %p55
    $region31: #{tpu_custom_call.1} parent=1 // pred_check_branch
      %487 = sbr.rel (%p485) target = $region33
    $region32: #{tpu_custom_call.1} parent=1 // pred_region
      %v488 = vld [vmem:[#allocation2] sm:$0xff]
      %v489 = vld [vmem:[#allocation2 + $0x8] sm:$0xff]
      %v490 = vld [vmem:[#allocation2 + $0x10] sm:$0xff]
      %v491 = vld [vmem:[#allocation2 + $0x18] sm:$0xff]
      %v492 = vld [vmem:[#allocation2 + $0x20] sm:$0xff]
      %v493 = vld [vmem:[#allocation2 + $0x28] sm:$0xff]
      %v494 = vld [vmem:[#allocation2 + $0x30] sm:$0xff]
      %v495 = vld [vmem:[#allocation2 + $0x38] sm:$0xff]
      %v496 = vld [vmem:[#allocation2 + $0x40] sm:$0xff]
      %v497 = vld [vmem:[#allocation2 + $0x48] sm:$0xff]
      %v498 = vld [vmem:[#allocation2 + $0x50] sm:$0xff]
      %v499 = vld [vmem:[#allocation2 + $0x58] sm:$0xff]
      %v500 = vld [vmem:[#allocation2 + $0x60] sm:$0xff]
      %v501 = vld [vmem:[#allocation2 + $0x68] sm:$0xff]
      %v502 = vld [vmem:[#allocation2 + $0x70] sm:$0xff]
      %v503 = vld [vmem:[#allocation2 + $0x78] sm:$0xff]
      %v504 = vld [vmem:[#allocation2 + $0x80] sm:$0xff]
      %v505 = vld [vmem:[#allocation2 + $0x88] sm:$0xff]
      %v506 = vld [vmem:[#allocation2 + $0x90] sm:$0xff]
      %v507 = vld [vmem:[#allocation2 + $0x98] sm:$0xff]
      %v508 = vld [vmem:[#allocation2 + $0xa0] sm:$0xff]
      %v509 = vld [vmem:[#allocation2 + $0xa8] sm:$0xff]
      %v510 = vld [vmem:[#allocation2 + $0xb0] sm:$0xff]
      %v511 = vld [vmem:[#allocation2 + $0xb8] sm:$0xff]
      %v512 = vld [vmem:[#allocation8] sm:$0x7]
      %v514 = vlaneseq
      %v515 = vshrl.u32 %v514, 7
      %v516 = vsub.s32 0, %v515
      %v517 = vrot.slane %v512, %v516
      %v518 = vlaneseq
      %v519 = vshrl.u32 %v518, 7
      %v520 = vsub.s32 1, %v519
      %v521 = vrot.slane %v512, %v520
      %v522 = vlaneseq
      %v523 = vshrl.u32 %v522, 7
      %v524 = vsub.s32 2, %v523
      %v525 = vrot.slane %v512, %v524
      %v529 = vadd.f32 %v488, %v517
      %v530 = vadd.f32 %v489, %v521
      %v531 = vadd.f32 %v490, %v525
      %v532 = vadd.f32 %v491, %v517
      %v533 = vadd.f32 %v492, %v521
      %v534 = vadd.f32 %v493, %v525
      %v535 = vadd.f32 %v494, %v517
      %v536 = vadd.f32 %v495, %v521
      %v537 = vadd.f32 %v496, %v525
      %v538 = vadd.f32 %v497, %v517
      %v539 = vadd.f32 %v498, %v521
      %v540 = vadd.f32 %v499, %v525
      %v541 = vadd.f32 %v500, %v517
      %v542 = vadd.f32 %v501, %v521
      %v543 = vadd.f32 %v502, %v525
      %v544 = vadd.f32 %v503, %v517
      %v545 = vadd.f32 %v504, %v521
      %v546 = vadd.f32 %v505, %v525
      %v547 = vadd.f32 %v506, %v517
      %v548 = vadd.f32 %v507, %v521
      %v549 = vadd.f32 %v508, %v525
      %v550 = vadd.f32 %v509, %v517
      %v551 = vadd.f32 %v510, %v521
      %v552 = vadd.f32 %v511, %v525
      %v553 = vpack.c.bf16 %v532, %v529
      %v554 = vpack.c.bf16 %v533, %v530
      %v555 = vpack.c.bf16 %v534, %v531
      %v556 = vpack.c.bf16 %v538, %v535
      %v557 = vpack.c.bf16 %v539, %v536
      %v558 = vpack.c.bf16 %v540, %v537
      %v559 = vpack.c.bf16 %v544, %v541
      %v560 = vpack.c.bf16 %v545, %v542
      %v561 = vpack.c.bf16 %v546, %v543
      %v562 = vpack.c.bf16 %v550, %v547
      %v563 = vpack.c.bf16 %v551, %v548
      %v564 = vpack.c.bf16 %v552, %v549
      %v577 = vunpack.c.l.b16 %v553
      %v578 = vunpack.c.l.b16 %v554
      %v579 = vunpack.c.l.b16 %v555
      %v580 = vunpack.c.h.b16 %v553
      %v581 = vunpack.c.h.b16 %v554
      %v582 = vunpack.c.h.b16 %v555
      %v583 = vunpack.c.l.b16 %v556
      %v584 = vunpack.c.l.b16 %v557
      %v585 = vunpack.c.l.b16 %v558
      %v586 = vunpack.c.h.b16 %v556
      %v587 = vunpack.c.h.b16 %v557
      %v588 = vunpack.c.h.b16 %v558
      %v589 = vunpack.c.l.b16 %v559
      %v590 = vunpack.c.l.b16 %v560
      %v591 = vunpack.c.l.b16 %v561
      %v592 = vunpack.c.h.b16 %v559
      %v593 = vunpack.c.h.b16 %v560
      %v594 = vunpack.c.h.b16 %v561
      %v595 = vunpack.c.l.b16 %v562
      %v596 = vunpack.c.l.b16 %v563
      %v597 = vunpack.c.l.b16 %v564
      %v598 = vunpack.c.h.b16 %v562
      %v599 = vunpack.c.h.b16 %v563
      %v600 = vunpack.c.h.b16 %v564
      %v601 = vpack.c.b16 %v578, %v577
      %v602 = vpack.c.b16 %v579, %v579
      %v603 = vpack.c.b16 %v581, %v580
      %v604 = vpack.c.b16 %v582, %v582
      %v605 = vpack.c.b16 %v584, %v583
      %v606 = vpack.c.b16 %v585, %v585
      %v607 = vpack.c.b16 %v587, %v586
      %v608 = vpack.c.b16 %v588, %v588
      %v609 = vpack.c.b16 %v590, %v589
      %v610 = vpack.c.b16 %v591, %v591
      %v611 = vpack.c.b16 %v593, %v592
      %v612 = vpack.c.b16 %v594, %v594
      %v613 = vpack.c.b16 %v596, %v595
      %v614 = vpack.c.b16 %v597, %v597
      %v615 = vpack.c.b16 %v599, %v598
      %v616 = vpack.c.b16 %v600, %v600
      %633 = vst [vmem:[#allocation9] sm:$0xff] %v601
      %634 = vst [vmem:[#allocation9 + $0x8] sm:$0xf] %v602
      %635 = vst [vmem:[#allocation9 + $0xc] sm:$0xff] %v603
      %636 = vst [vmem:[#allocation9 + $0x14] sm:$0xf] %v604
      %637 = vst [vmem:[#allocation9 + $0x18] sm:$0xff] %v605
      %638 = vst [vmem:[#allocation9 + $0x20] sm:$0xf] %v606
      %639 = vst [vmem:[#allocation9 + $0x24] sm:$0xff] %v607
      %640 = vst [vmem:[#allocation9 + $0x2c] sm:$0xf] %v608
      %641 = vst [vmem:[#allocation9 + $0x30] sm:$0xff] %v609
      %642 = vst [vmem:[#allocation9 + $0x38] sm:$0xf] %v610
      %643 = vst [vmem:[#allocation9 + $0x3c] sm:$0xff] %v611
      %644 = vst [vmem:[#allocation9 + $0x44] sm:$0xf] %v612
      %645 = vst [vmem:[#allocation9 + $0x48] sm:$0xff] %v613
      %646 = vst [vmem:[#allocation9 + $0x50] sm:$0xf] %v614
      %647 = vst [vmem:[#allocation9 + $0x54] sm:$0xff] %v615
      %648 = vst [vmem:[#allocation9 + $0x5c] sm:$0xf] %v616
    $region33: #{tpu_custom_call.1} parent=1 // pred_fallthru
      _
    // Predicated region
    $region34: #{tpu_custom_call.1} parent=1 // pred_check
      _
    $region35: #{tpu_custom_call.1} parent=1 // pred_check_branch
      %650 = sbr.rel (0) target = $region37
    $region36: #{tpu_custom_call.1} parent=1 // pred_region
      %s652 = ssub.s32 1536, 1536
      %653 = vsyncadd [#allocation5], %s652
      %s654 = sshll.u32 [#allocation9], 4
      %s655 = int_to_ptr.vmem [resolvable:$true] %s654
      %660 = dma.vmem_to_hbm [thread:$0]  %s655, 1536, %s3, [#allocation5], 192, 192, 12
    $region37: #{tpu_custom_call.1} parent=1 // pred_fallthru
      _
    // Predicated region
    $region38: #{tpu_custom_call.1} parent=1 // pred_check
      _
    $region39: #{tpu_custom_call.1} parent=1 // pred_check_branch
      %662 = sbr.rel (0) target = $region41
    $region40: #{tpu_custom_call.1} parent=1 // pred_region
      %663 = dma.done [#allocation5], 1536
    $region41: #{tpu_custom_call.1} parent=1 // pred_fallthru
      _
    %664 = vsyncpa [#allocation4], 1
    %665 = vsyncpa [#allocation7], 1
    %666 = vsyncpa [#allocation5], 1

</llo_original>
